<compile_context>
chip_gen: v7x
topology: tpu7x:2x2x1
jax: 0.10.0
libtpu: 0.0.40
codegen_flags: <defaults>
</compile_context>

<pallas_src>
import functools

import jax
import jax.numpy as jnp
from jax.experimental import pallas as pl
from jax.experimental.pallas import tpu as pltpu


def titanic_mlp_kernel(x_ref, w1_ref, b1_ref, w2_ref, b2_ref,
                       w3_ref, b3_ref, w4_ref, b4_ref, o_ref):
    """Forward pass for one (F, TB) batch tile; batch rides on the lane axis."""
    xt = x_ref[...]                                             # (F, TB) bf16

    # fc1 + ReLU   (dropout -> identity in eval/inference mode)
    h = jnp.dot(w1_ref[...], xt,
                preferred_element_type=jnp.float32) + b1_ref[...]   # (128, TB) f32
    h = jnp.maximum(h, 0.0)

    # fc2 + ReLU
    h = jnp.dot(w2_ref[...], h.astype(w2_ref.dtype),
                preferred_element_type=jnp.float32) + b2_ref[...]   # (64, TB) f32
    h = jnp.maximum(h, 0.0)

    # fc3 + ReLU
    h = jnp.dot(w3_ref[...], h.astype(w3_ref.dtype),
                preferred_element_type=jnp.float32) + b3_ref[...]   # (32, TB) f32
    h = jnp.maximum(h, 0.0)

    # fc4 + sigmoid: output width is 1, so skip the MXU.  VPU multiply against the
    # (32, 1) weight column (lane-broadcast) + sublane reduce; scalar bias from SMEM.
    logits = jnp.sum(h * w4_ref[...], axis=0, keepdims=True) + b4_ref[0, 0]  # (1, TB)
    # Manual, numerically safe sigmoid (exp on EUP; f32 throughout).
    probs = 1.0 / (1.0 + jnp.exp(-logits))

    # Lane-dense, unmasked store: exactly 4 B of HBM writeback per batch row.
    o_ref[...] = probs


def _round_up(n, m):
    return ((n + m - 1) // m) * m


@functools.partial(jax.jit, static_argnames=("block_b",))
def titanic_forward(x, params, block_b=8192):
    """Batch-tiled pallas_call; params stay VMEM-resident, x/out tiles are pipelined."""
    w1, b1, w2, b2, w3, b3, w4, b4 = params        # PyTorch layout: W (out, in), b (out,)
    B, F = x.shape
    assert block_b % 512 == 0

    cdt = jnp.bfloat16                             # MXU input dtype; accum/elementwise f32
    w1c = w1.astype(cdt)
    w2c = w2.astype(cdt)
    w3c = w3.astype(cdt)
    b1c = b1.reshape(-1, 1).astype(jnp.float32)
    b2c = b2.reshape(-1, 1).astype(jnp.float32)
    b3c = b3.reshape(-1, 1).astype(jnp.float32)
    w4c = w4.reshape(-1, 1).astype(jnp.float32)    # (32, 1) column for the VPU path
    b4c = b4.reshape(1, 1).astype(jnp.float32)     # scalar bias -> SMEM

    # Batch tile (lane dim): multiple of 512, capped at block_b, and small enough
    # that the grid gets >=4 steps when the batch allows it (v7x has 2 TCs and the
    # "parallel" axis only helps if there are multiple tiles to shard).
    quarter = -(-B // 4)
    TB = max(512, min(block_b, _round_up(quarter, 512)))
    B_pad = _round_up(B, TB)
    if B_pad != B:
        x = jnp.pad(x, ((0, B_pad - B), (0, 0)))   # padded rows are sliced off below

    # One fused XLA cast+transpose pass: kernel input DMAs are then contiguous and
    # the output is naturally lane-dense (batch on lanes).
    xt = x.astype(cdt).T                           # (F, B_pad) bf16

    grid = (B_pad // TB,)

    def const_spec(a):
        # Full-array block, same index every grid step -> stays resident in VMEM.
        return pl.BlockSpec(a.shape, lambda i: (0, 0))

    out = pl.pallas_call(
        titanic_mlp_kernel,
        out_shape=jax.ShapeDtypeStruct((1, B_pad), jnp.float32),
        grid=grid,
        in_specs=[
            pl.BlockSpec((F, TB), lambda i: (0, i)),            # x^T: batch-tiled on lanes
            const_spec(w1c), const_spec(b1c),
            const_spec(w2c), const_spec(b2c),
            const_spec(w3c), const_spec(b3c),
            const_spec(w4c),
            pl.BlockSpec(memory_space=pltpu.MemorySpace.SMEM),  # b4 scalar
        ],
        out_specs=pl.BlockSpec((1, TB), lambda i: (0, i)),      # lane-dense packed output
        compiler_params=pltpu.CompilerParams(
            dimension_semantics=("parallel",),                  # megacore sharding on v7x
            vmem_limit_bytes=32 * 1024 * 1024),
    )(xt, w1c, b1c, w2c, b2c, w3c, b3c, w4c, b4c)

    # Row 0 of the (1, B_pad) result holds the probabilities; drop batch padding.
    return out[0, :B].reshape(B, 1)


def init_linear(key, fan_in, fan_out):
    """nn.Linear default init, in PyTorch (out, in) layout: U(-1/sqrt(fan_in), 1/sqrt(fan_in))."""
    kw, kb = jax.random.split(key)
    bound = 1.0 / jnp.sqrt(jnp.float32(fan_in))
    w = jax.random.uniform(kw, (fan_out, fan_in), jnp.float32, -bound, bound)
    b = jax.random.uniform(kb, (fan_out,), jnp.float32, -bound, bound)
    return w, b


def reference_forward(x, params):
    """Pure-JAX f32 reference with PyTorch-layout weights (x @ W^T + b)."""
    w1, b1, w2, b2, w3, b3, w4, b4 = params
    h = jnp.maximum(x @ w1.T + b1, 0.0)
    h = jnp.maximum(h @ w2.T + b2, 0.0)
    h = jnp.maximum(h @ w3.T + b3, 0.0)
    return jax.nn.sigmoid(h @ w4.T + b4)


if __name__ == "__main__":
    key = jax.random.PRNGKey(0)
    k_x, k1, k2, k3, k4 = jax.random.split(key, 5)

    F = 8          # Titanic feature count (X_train.shape[1] analogue)

    w1, b1 = init_linear(k1, F, 128)
    w2, b2 = init_linear(k2, 128, 64)
    w3, b3 = init_linear(k3, 64, 32)
    w4, b4 = init_linear(k4, 32, 1)
    params = (w1, b1, w2, b2, w3, b3, w4, b4)

    # TODO(synk): nn.Dropout(0.5) is identity here (eval/inference semantics);
    # train-mode stochastic masking is intentionally not implemented.

    # Small single-tile batch, plus a non-multiple batch that exercises padding
    # and a 2-step grid.
    for B in (16, 700):
        xb = jax.random.normal(jax.random.fold_in(k_x, B), (B, F), jnp.float32)
        out = titanic_forward(xb, params)
        jax.block_until_ready(out)
        ref = reference_forward(xb, params)
        assert out.shape == (B, 1)
        assert bool(jnp.all(jnp.isfinite(out)))
        # bf16 inputs/weights on the MXU path -> looser tolerance than pure f32.
        assert jnp.allclose(out, ref, atol=2e-2, rtol=2e-2), \
            float(jnp.max(jnp.abs(out - ref)))

    print("KERNEL_OK")
</pallas_src>

<mosaic_0001>
module attributes {stable_mosaic.version = 11 : i64} {
  func.func @titanic_mlp_kernel(%arg0: i32, %arg1: memref<8x512xbf16, #tpu.memory_space<vmem>>, %arg2: memref<128x8xbf16, #tpu.memory_space<vmem>>, %arg3: memref<128x1xf32, #tpu.memory_space<vmem>>, %arg4: memref<64x128xbf16, #tpu.memory_space<vmem>>, %arg5: memref<64x1xf32, #tpu.memory_space<vmem>>, %arg6: memref<32x64xbf16, #tpu.memory_space<vmem>>, %arg7: memref<32x1xf32, #tpu.memory_space<vmem>>, %arg8: memref<32x1xf32, #tpu.memory_space<vmem>>, %arg9: memref<1x1xf32, #tpu.memory_space<smem>>, %arg10: memref<1x512xf32, #tpu.memory_space<vmem>>) attributes {dimension_semantics = [#tpu.dimension_semantics<parallel>], iteration_bounds = array<i64: 1>, scalar_prefetch = 0 : i64, scratch_operands = 0 : i64, tpu.core_type = #tpu.core_type<tc>, window_params = [{transform_indices = @transform_0, window_bounds = array<i64: 8, 512>}, {pipeline_mode = #tpu.pipeline_mode<synchronous>, transform_indices = @transform_1, window_bounds = array<i64: 128, 8>}, {pipeline_mode = #tpu.pipeline_mode<synchronous>, transform_indices = @transform_2, window_bounds = array<i64: 128, 1>}, {pipeline_mode = #tpu.pipeline_mode<synchronous>, transform_indices = @transform_3, window_bounds = array<i64: 64, 128>}, {pipeline_mode = #tpu.pipeline_mode<synchronous>, transform_indices = @transform_4, window_bounds = array<i64: 64, 1>}, {pipeline_mode = #tpu.pipeline_mode<synchronous>, transform_indices = @transform_5, window_bounds = array<i64: 32, 64>}, {pipeline_mode = #tpu.pipeline_mode<synchronous>, transform_indices = @transform_6, window_bounds = array<i64: 32, 1>}, {pipeline_mode = #tpu.pipeline_mode<synchronous>, transform_indices = @transform_7, window_bounds = array<i64: 32, 1>}, {transform_indices = @transform_8, window_bounds = array<i64: 1, 1>}, {transform_indices = @transform_9, window_bounds = array<i64: 1, 512>}]} {
    %c0 = arith.constant 0 : index
    %c0_0 = arith.constant 0 : index
    %0 = vector.load %arg1[%c0, %c0_0] : memref<8x512xbf16, #tpu.memory_space<vmem>>, vector<8x512xbf16>
    %c0_1 = arith.constant 0 : index
    %c0_2 = arith.constant 0 : index
    %1 = vector.load %arg2[%c0_1, %c0_2] : memref<128x8xbf16, #tpu.memory_space<vmem>>, vector<128x8xbf16>
    %cst = arith.constant dense<0.000000e+00> : vector<128x512xf32>
    %2 = tpu.matmul %1, %0, %cst {dimension_numbers = #tpu.dot_dimension_numbers<[1], [0], [0], [1], [0, 0, 1, 1], [], []>} : vector<128x8xbf16>, vector<8x512xbf16>, vector<128x512xf32> -> vector<128x512xf32>
    %c0_3 = arith.constant 0 : index
    %c0_4 = arith.constant 0 : index
    %3 = vector.load %arg3[%c0_3, %c0_4] : memref<128x1xf32, #tpu.memory_space<vmem>>, vector<128x1xf32>
    %4 = vector.broadcast %3 : vector<128x1xf32> to vector<128x512xf32>
    %5 = arith.addf %2, %4 : vector<128x512xf32>
    %cst_5 = arith.constant 0.000000e+00 : f32
    %6 = vector.broadcast %cst_5 : f32 to vector<128x512xf32>
    %7 = arith.maximumf %5, %6 : vector<128x512xf32>
    %c0_6 = arith.constant 0 : index
    %c0_7 = arith.constant 0 : index
    %8 = vector.load %arg4[%c0_6, %c0_7] : memref<64x128xbf16, #tpu.memory_space<vmem>>, vector<64x128xbf16>
    %9 = arith.truncf %7 : vector<128x512xf32> to vector<128x512xbf16>
    %cst_8 = arith.constant dense<0.000000e+00> : vector<64x512xf32>
    %10 = tpu.matmul %8, %9, %cst_8 {dimension_numbers = #tpu.dot_dimension_numbers<[1], [0], [0], [1], [0, 0, 1, 1], [], []>} : vector<64x128xbf16>, vector<128x512xbf16>, vector<64x512xf32> -> vector<64x512xf32>
    %c0_9 = arith.constant 0 : index
    %c0_10 = arith.constant 0 : index
    %11 = vector.load %arg5[%c0_9, %c0_10] : memref<64x1xf32, #tpu.memory_space<vmem>>, vector<64x1xf32>
    %12 = vector.broadcast %11 : vector<64x1xf32> to vector<64x512xf32>
    %13 = arith.addf %10, %12 : vector<64x512xf32>
    %cst_11 = arith.constant 0.000000e+00 : f32
    %14 = vector.broadcast %cst_11 : f32 to vector<64x512xf32>
    %15 = arith.maximumf %13, %14 : vector<64x512xf32>
    %c0_12 = arith.constant 0 : index
    %c0_13 = arith.constant 0 : index
    %16 = vector.load %arg6[%c0_12, %c0_13] : memref<32x64xbf16, #tpu.memory_space<vmem>>, vector<32x64xbf16>
    %17 = arith.truncf %15 : vector<64x512xf32> to vector<64x512xbf16>
    %cst_14 = arith.constant dense<0.000000e+00> : vector<32x512xf32>
    %18 = tpu.matmul %16, %17, %cst_14 {dimension_numbers = #tpu.dot_dimension_numbers<[1], [0], [0], [1], [0, 0, 1, 1], [], []>} : vector<32x64xbf16>, vector<64x512xbf16>, vector<32x512xf32> -> vector<32x512xf32>
    %c0_15 = arith.constant 0 : index
    %c0_16 = arith.constant 0 : index
    %19 = vector.load %arg7[%c0_15, %c0_16] : memref<32x1xf32, #tpu.memory_space<vmem>>, vector<32x1xf32>
    %20 = vector.broadcast %19 : vector<32x1xf32> to vector<32x512xf32>
    %21 = arith.addf %18, %20 : vector<32x512xf32>
    %cst_17 = arith.constant 0.000000e+00 : f32
    %22 = vector.broadcast %cst_17 : f32 to vector<32x512xf32>
    %23 = arith.maximumf %21, %22 : vector<32x512xf32>
    %c0_18 = arith.constant 0 : index
    %c0_19 = arith.constant 0 : index
    %24 = vector.load %arg8[%c0_18, %c0_19] : memref<32x1xf32, #tpu.memory_space<vmem>>, vector<32x1xf32>
    %25 = vector.broadcast %24 : vector<32x1xf32> to vector<32x512xf32>
    %26 = arith.mulf %23, %25 : vector<32x512xf32>
    %cst_20 = arith.constant dense<0.000000e+00> : vector<512xf32>
    %27 = vector.multi_reduction <add>, %26, %cst_20 [0] : vector<32x512xf32> to vector<512xf32>
    %28 = vector.shape_cast %27 : vector<512xf32> to vector<1x512xf32>
    %c0_21 = arith.constant 0 : index
    %c0_22 = arith.constant 0 : index
    %29 = memref.load %arg9[%c0_21, %c0_22] : memref<1x1xf32, #tpu.memory_space<smem>>
    %30 = vector.broadcast %29 : f32 to vector<1x512xf32>
    %31 = arith.addf %28, %30 : vector<1x512xf32>
    %cst_23 = arith.constant 0.000000e+00 : f32
    %32 = vector.broadcast %cst_23 : f32 to vector<1x512xf32>
    %33 = arith.subf %32, %31 : vector<1x512xf32>
    %34 = math.exp %33 : vector<1x512xf32>
    %cst_24 = arith.constant 1.000000e+00 : f32
    %35 = vector.broadcast %cst_24 : f32 to vector<1x512xf32>
    %36 = arith.addf %35, %34 : vector<1x512xf32>
    %cst_25 = arith.constant 1.000000e+00 : f32
    %37 = vector.broadcast %cst_25 : f32 to vector<1x512xf32>
    %38 = arith.divf %37, %36 : vector<1x512xf32>
    %c0_26 = arith.constant 0 : index
    %c0_27 = arith.constant 0 : index
    %39 = vector.load %arg10[%c0_26, %c0_27] : memref<1x512xf32, #tpu.memory_space<vmem>>, vector<1x512xf32>
    tpu.vector_store %arg10[%c0_26, %c0_27], %38 {strides = array<i32>} : memref<1x512xf32, #tpu.memory_space<vmem>>, vector<1x512xf32>,
    return
  }
  func.func @transform_0(%arg0: i32) -> (i32, i32) {
    %c0_i32 = arith.constant 0 : i32
    %c0_i32_0 = arith.constant 0 : i32
    return %c0_i32, %arg0 : i32, i32
  }
  func.func @transform_1(%arg0: i32) -> (i32, i32) {
    %c0_i32 = arith.constant 0 : i32
    %c0_i32_0 = arith.constant 0 : i32
    %c0_i32_1 = arith.constant 0 : i32
    return %c0_i32, %c0_i32_0 : i32, i32
  }
  func.func @transform_2(%arg0: i32) -> (i32, i32) {
    %c0_i32 = arith.constant 0 : i32
    %c0_i32_0 = arith.constant 0 : i32
    %c0_i32_1 = arith.constant 0 : i32
    return %c0_i32, %c0_i32_0 : i32, i32
  }
  func.func @transform_3(%arg0: i32) -> (i32, i32) {
    %c0_i32 = arith.constant 0 : i32
    %c0_i32_0 = arith.constant 0 : i32
    %c0_i32_1 = arith.constant 0 : i32
    return %c0_i32, %c0_i32_0 : i32, i32
  }
  func.func @transform_4(%arg0: i32) -> (i32, i32) {
    %c0_i32 = arith.constant 0 : i32
    %c0_i32_0 = arith.constant 0 : i32
    %c0_i32_1 = arith.constant 0 : i32
    return %c0_i32, %c0_i32_0 : i32, i32
  }
  func.func @transform_5(%arg0: i32) -> (i32, i32) {
    %c0_i32 = arith.constant 0 : i32
    %c0_i32_0 = arith.constant 0 : i32
    %c0_i32_1 = arith.constant 0 : i32
    return %c0_i32, %c0_i32_0 : i32, i32
  }
  func.func @transform_6(%arg0: i32) -> (i32, i32) {
    %c0_i32 = arith.constant 0 : i32
    %c0_i32_0 = arith.constant 0 : i32
    %c0_i32_1 = arith.constant 0 : i32
    return %c0_i32, %c0_i32_0 : i32, i32
  }
  func.func @transform_7(%arg0: i32) -> (i32, i32) {
    %c0_i32 = arith.constant 0 : i32
    %c0_i32_0 = arith.constant 0 : i32
    %c0_i32_1 = arith.constant 0 : i32
    return %c0_i32, %c0_i32_0 : i32, i32
  }
  func.func @transform_8(%arg0: i32) -> (i32, i32) {
    %c0_i32 = arith.constant 0 : i32
    %c0_i32_0 = arith.constant 0 : i32
    %c0_i32_1 = arith.constant 0 : i32
    return %c0_i32, %c0_i32_0 : i32, i32
  }
  func.func @transform_9(%arg0: i32) -> (i32, i32) {
    %c0_i32 = arith.constant 0 : i32
    %c0_i32_0 = arith.constant 0 : i32
    return %c0_i32, %arg0 : i32, i32
  }
}

</mosaic_0001>

<llo_original>
// kernel: titanic_forward.1
$region0: #{titanic_forward.1}
  #allocation0 [shape = 'u32[]', space=smem, size = 0x4, offset = 0x4, fixed_abs, tag = 'smem constant byte address 0x4 - core index']
  #allocation1 [shape = 'u32[144,128]{1,0:T(1,128)}', space=vmem, size = 0x12000, scoped, tag = 'internal scratch']
  #allocation2 [shape = 'f32[1,1]{1,0:T(1,128)S(6)}', space=smem, size = 0x200, scoped, tag = 'scoped memory for titanic_forward.1']
  %s0 = inlined_call_operand.vmem [shape: bf16[8,512], index: 0, kind: input, shape index: {}]
  %s1 = inlined_call_operand.vmem [shape: bf16[128,8], index: 1, kind: input, shape index: {}]
  %s2 = inlined_call_operand.vmem [shape: f32[128,1], index: 2, kind: input, shape index: {}]
  %s3 = inlined_call_operand.vmem [shape: bf16[64,128], index: 3, kind: input, shape index: {}]
  %s4 = inlined_call_operand.vmem [shape: f32[64,1], index: 4, kind: input, shape index: {}]
  %s5 = inlined_call_operand.vmem [shape: bf16[32,64], index: 5, kind: input, shape index: {}]
  %s6 = inlined_call_operand.vmem [shape: f32[32,1], index: 6, kind: input, shape index: {}]
  %s7 = inlined_call_operand.vmem [shape: f32[32,1], index: 7, kind: input, shape index: {}]
  %s8 = inlined_call_operand.<no memory space> [shape: f32[1,1], index: 8, kind: input, shape index: {}]
  %s9 = inlined_call_operand.vmem [shape: f32[1,512], index: 9, kind: output, shape index: {}]
  %s10 = sld [smem:[#allocation0]]
  $region46: #{titanic_forward.1} parent=0
    _
  %s12 = ssub.s32 1, %s10
  %s13 = scalar_select 0, %s12, %s10
  %14 = sst [smem:[#allocation2]] %s8
  // Predicated region
  $region2: #{titanic_forward.1} parent=0 // pred_check
    _
  $region3: #{titanic_forward.1} parent=0 // pred_check_branch
    %16 = sbr.rel (0) target = $region5
  $region4: #{titanic_forward.1} parent=0 // pred_region
    _
  $region5: #{titanic_forward.1} parent=0 // pred_fallthru
    _
  // Predicated region
  $region6: #{titanic_forward.1} parent=0 // pred_check
    _
  $region7: #{titanic_forward.1} parent=0 // pred_check_branch
    %18 = sbr.rel (0) target = $region9
  $region8: #{titanic_forward.1} parent=0 // pred_region
    _
  $region9: #{titanic_forward.1} parent=0 // pred_fallthru
    _
  // Predicated region
  $region10: #{titanic_forward.1} parent=0 // pred_check
    _
  $region11: #{titanic_forward.1} parent=0 // pred_check_branch
    %20 = sbr.rel (0) target = $region13
  $region12: #{titanic_forward.1} parent=0 // pred_region
    _
  $region13: #{titanic_forward.1} parent=0 // pred_fallthru
    _
  // Predicated region
  $region14: #{titanic_forward.1} parent=0 // pred_check
    _
  $region15: #{titanic_forward.1} parent=0 // pred_check_branch
    %22 = sbr.rel (0) target = $region17
  $region16: #{titanic_forward.1} parent=0 // pred_region
    _
  $region17: #{titanic_forward.1} parent=0 // pred_fallthru
    _
  // Predicated region
  $region18: #{titanic_forward.1} parent=0 // pred_check
    _
  $region19: #{titanic_forward.1} parent=0 // pred_check_branch
    %24 = sbr.rel (0) target = $region21
  $region20: #{titanic_forward.1} parent=0 // pred_region
    _
  $region21: #{titanic_forward.1} parent=0 // pred_fallthru
    _
  // Predicated region
  $region22: #{titanic_forward.1} parent=0 // pred_check
    _
  $region23: #{titanic_forward.1} parent=0 // pred_check_branch
    %26 = sbr.rel (0) target = $region25
  $region24: #{titanic_forward.1} parent=0 // pred_region
    _
  $region25: #{titanic_forward.1} parent=0 // pred_fallthru
    _
  // Predicated region
  $region26: #{titanic_forward.1} parent=0 // pred_check
    _
  $region27: #{titanic_forward.1} parent=0 // pred_check_branch
    %28 = sbr.rel (0) target = $region29
  $region28: #{titanic_forward.1} parent=0 // pred_region
    _
  $region29: #{titanic_forward.1} parent=0 // pred_fallthru
    _
  // Predicated region
  $region30: #{titanic_forward.1} parent=0 // pred_check
    _
  $region31: #{titanic_forward.1} parent=0 // pred_check_branch
    %30 = sbr.rel (0) target = $region33
  $region32: #{titanic_forward.1} parent=0 // pred_region
    _
  $region33: #{titanic_forward.1} parent=0 // pred_fallthru
    _
  // Predicated region
  $region34: #{titanic_forward.1} parent=0 // pred_check
    _
  $region35: #{titanic_forward.1} parent=0 // pred_check_branch
    %32 = sbr.rel (0) target = $region37
  $region36: #{titanic_forward.1} parent=0 // pred_region
    _
  $region37: #{titanic_forward.1} parent=0 // pred_fallthru
    _
  %v34 = vld [vmem:[%s0] sm:$0xff]
  %v35 = vld [vmem:[%s0 + $0x8] sm:$0xff]
  %v36 = vld [vmem:[%s1] sm:$0xf]
  %v37 = vld [vmem:[%s1 + $0x4] sm:$0xf]
  %v38 = vld [vmem:[%s1 + $0x8] sm:$0xf]
  %v39 = vld [vmem:[%s1 + $0xc] sm:$0xf]
  %v40 = vld [vmem:[%s1 + $0x10] sm:$0xf]
  %v41 = vld [vmem:[%s1 + $0x14] sm:$0xf]
  %v42 = vld [vmem:[%s1 + $0x18] sm:$0xf]
  %v43 = vld [vmem:[%s1 + $0x1c] sm:$0xf]
  %v44 = vld [vmem:[%s1 + $0x20] sm:$0xf]
  %v45 = vld [vmem:[%s1 + $0x24] sm:$0xf]
  %v46 = vld [vmem:[%s1 + $0x28] sm:$0xf]
  %v47 = vld [vmem:[%s1 + $0x2c] sm:$0xf]
  %v48 = vld [vmem:[%s1 + $0x30] sm:$0xf]
  %v49 = vld [vmem:[%s1 + $0x34] sm:$0xf]
  %v50 = vld [vmem:[%s1 + $0x38] sm:$0xf]
  %v51 = vld [vmem:[%s1 + $0x3c] sm:$0xf]
  %v52 = vld [vmem:[%s2] sm:$0xff]
  %v53 = vld [vmem:[%s2 + $0x8] sm:$0xff]
  %v54 = vld [vmem:[%s2 + $0x10] sm:$0xff]
  %v55 = vld [vmem:[%s2 + $0x18] sm:$0xff]
  %v56 = vld [vmem:[%s2 + $0x20] sm:$0xff]
  %v57 = vld [vmem:[%s2 + $0x28] sm:$0xff]
  %v58 = vld [vmem:[%s2 + $0x30] sm:$0xff]
  %v59 = vld [vmem:[%s2 + $0x38] sm:$0xff]
  %v60 = vld [vmem:[%s2 + $0x40] sm:$0xff]
  %v61 = vld [vmem:[%s2 + $0x48] sm:$0xff]
  %v62 = vld [vmem:[%s2 + $0x50] sm:$0xff]
  %v63 = vld [vmem:[%s2 + $0x58] sm:$0xff]
  %v64 = vld [vmem:[%s2 + $0x60] sm:$0xff]
  %v65 = vld [vmem:[%s2 + $0x68] sm:$0xff]
  %v66 = vld [vmem:[%s2 + $0x70] sm:$0xff]
  %v67 = vld [vmem:[%s2 + $0x78] sm:$0xff]
  %69 = vset.pattern.permute.xlu0 0
  %70 = vperm.xlu0 %69, %v52
  %v71 = vpop.permute.xlu0 %70
  %74 = vset.pattern.permute.xlu0 0
  %75 = vperm.xlu0 %74, %v53
  %v76 = vpop.permute.xlu0 %75
  %79 = vset.pattern.permute.xlu0 0
  %80 = vperm.xlu0 %79, %v54
  %v81 = vpop.permute.xlu0 %80
  %84 = vset.pattern.permute.xlu0 0
  %85 = vperm.xlu0 %84, %v55
  %v86 = vpop.permute.xlu0 %85
  %89 = vset.pattern.permute.xlu0 0
  %90 = vperm.xlu0 %89, %v56
  %v91 = vpop.permute.xlu0 %90
  %94 = vset.pattern.permute.xlu0 0
  %95 = vperm.xlu0 %94, %v57
  %v96 = vpop.permute.xlu0 %95
  %99 = vset.pattern.permute.xlu0 0
  %100 = vperm.xlu0 %99, %v58
  %v101 = vpop.permute.xlu0 %100
  %104 = vset.pattern.permute.xlu0 0
  %105 = vperm.xlu0 %104, %v59
  %v106 = vpop.permute.xlu0 %105
  %109 = vset.pattern.permute.xlu0 0
  %110 = vperm.xlu0 %109, %v60
  %v111 = vpop.permute.xlu0 %110
  %114 = vset.pattern.permute.xlu0 0
  %115 = vperm.xlu0 %114, %v61
  %v116 = vpop.permute.xlu0 %115
  %119 = vset.pattern.permute.xlu0 0
  %120 = vperm.xlu0 %119, %v62
  %v121 = vpop.permute.xlu0 %120
  %124 = vset.pattern.permute.xlu0 0
  %125 = vperm.xlu0 %124, %v63
  %v126 = vpop.permute.xlu0 %125
  %129 = vset.pattern.permute.xlu0 0
  %130 = vperm.xlu0 %129, %v64
  %v131 = vpop.permute.xlu0 %130
  %134 = vset.pattern.permute.xlu0 0
  %135 = vperm.xlu0 %134, %v65
  %v136 = vpop.permute.xlu0 %135
  %139 = vset.pattern.permute.xlu0 0
  %140 = vperm.xlu0 %139, %v66
  %v141 = vpop.permute.xlu0 %140
  %144 = vset.pattern.permute.xlu0 0
  %145 = vperm.xlu0 %144, %v67
  %v146 = vpop.permute.xlu0 %145
  %v164 = vunpack.c.l.b16 %v36
  %v165 = vunpack.c.l.b16 %v37
  %v166 = vunpack.c.l.b16 %v38
  %v167 = vunpack.c.l.b16 %v39
  %v168 = vunpack.c.l.b16 %v40
  %v169 = vunpack.c.l.b16 %v41
  %v170 = vunpack.c.l.b16 %v42
  %v171 = vunpack.c.l.b16 %v43
  %v172 = vunpack.c.l.b16 %v44
  %v173 = vunpack.c.l.b16 %v45
  %v174 = vunpack.c.l.b16 %v46
  %v175 = vunpack.c.l.b16 %v47
  %v176 = vunpack.c.l.b16 %v48
  %v177 = vunpack.c.l.b16 %v49
  %v178 = vunpack.c.l.b16 %v50
  %v179 = vunpack.c.l.b16 %v51
  %v180 = vpack.c.b16 %v165, %v164
  %v181 = vpack.c.b16 %v167, %v166
  %v182 = vpack.c.b16 %v169, %v168
  %v183 = vpack.c.b16 %v171, %v170
  %v184 = vpack.c.b16 %v173, %v172
  %v185 = vpack.c.b16 %v175, %v174
  %v186 = vpack.c.b16 %v177, %v176
  %v187 = vpack.c.b16 %v179, %v178
  %v190 = vunpack.c.l.b16 %v34
  %v191 = vunpack.c.h.b16 %v34
  %v192 = vunpack.c.l.b16 %v35
  %v193 = vunpack.c.h.b16 %v35
  %v194 = vpack.c.b16 %v190, %v190
  %v195 = vpack.c.b16 %v191, %v191
  %v196 = vpack.c.b16 %v192, %v192
  %v197 = vpack.c.b16 %v193, %v193
  %vm198 = vcmask 64512
  %v200 = vsel %vm198, %v180, 0
  %v203 = vsel %vm198, %v181, 0
  %v206 = vsel %vm198, %v182, 0
  %v209 = vsel %vm198, %v183, 0
  %v212 = vsel %vm198, %v184, 0
  %v215 = vsel %vm198, %v185, 0
  %v218 = vsel %vm198, %v186, 0
  %v221 = vsel %vm198, %v187, 0
  %vm223 = vcmask 1043456
  %v225 = vsel %vm223, %v194, 0
  %v228 = vsel %vm223, %v195, 0
  %v231 = vsel %vm223, %v196, 0
  %v234 = vsel %vm223, %v197, 0
  %236 = vmatprep.subr.bf16.mxu0 %v228
  %237 = vmatpush1.bf16.msra.mxu0 %v225
  %238 = vmatprep.subr.bf16.mxu0 0
  %239 = vmatpush1.bf16.msra.mxu0 0
  %240 = vmatprep.subr.bf16.mxu0 0
  %241 = vmatpush1.bf16.msra.mxu0 0
  %242 = vmatprep.subr.bf16.mxu0 0
  %243 = vmatpush1.bf16.msra.mxu0 0
  %244 = vmatprep.subr.bf16.mxu0 0
  %245 = vmatpush1.bf16.msra.mxu0 0
  %246 = vmatprep.subr.bf16.mxu0 0
  %247 = vmatpush1.bf16.msra.mxu0 0
  %248 = vmatprep.subr.bf16.mxu0 0
  %249 = vmatpush1.bf16.msra.mxu0 0
  %250 = vmatprep.subr.bf16.mxu0 0
  %251 = vmatpush1.bf16.msra.mxu0 0
  %252 = vmatprep.subr.bf16.mxu0 0
  %253 = vmatpush1.bf16.msra.mxu0 0
  %254 = vmatprep.subr.bf16.mxu0 0
  %255 = vmatpush1.bf16.msra.mxu0 0
  %256 = vmatprep.subr.bf16.mxu0 0
  %257 = vmatpush1.bf16.msra.mxu0 0
  %258 = vmatprep.subr.bf16.mxu0 0
  %259 = vmatpush1.bf16.msra.mxu0 0
  %260 = vmatprep.subr.bf16.mxu0 0
  %261 = vmatpush1.bf16.msra.mxu0 0
  %262 = vmatprep.subr.bf16.mxu0 0
  %263 = vmatpush1.bf16.msra.mxu0 0
  %264 = vmatprep.subr.bf16.mxu0 0
  %265 = vmatpush1.bf16.msra.mxu0 0
  %266 = vmatprep.subr.bf16.mxu0 0
  %267 = vmatpush1.bf16.msra.mxu0 0
  %268 = vmatprep.mubr.bf16.mxu0 0
  %269 = vmatmul.mubr.bf16.gmra.mrb[0].mxu0 %v200
  %v270 = vpop.f32.mrb[0].mxu0
  %v271 = vadd.f32 %v71, %v270
  %v272 = vpop.f32.mrb[0].mxu0
  %v273 = vadd.f32 %v71, %v272
  %v274 = vpop.f32.mrb[0].mxu0
  %v275 = vadd.f32 %v76, %v274
  %v276 = vpop.f32.mrb[0].mxu0
  %v277 = vadd.f32 %v76, %v276
  %278 = vmatprep.mubr.bf16.mxu0 0
  %279 = vmatmul.mubr.bf16.gmra.mrb[0].mxu0 %v203
  %v280 = vpop.f32.mrb[0].mxu0
  %v281 = vadd.f32 %v81, %v280
  %v282 = vpop.f32.mrb[0].mxu0
  %v283 = vadd.f32 %v81, %v282
  %v284 = vpop.f32.mrb[0].mxu0
  %v285 = vadd.f32 %v86, %v284
  %v286 = vpop.f32.mrb[0].mxu0
  %v287 = vadd.f32 %v86, %v286
  %288 = vmatprep.mubr.bf16.mxu0 0
  %289 = vmatmul.mubr.bf16.gmra.mrb[0].mxu0 %v206
  %v290 = vpop.f32.mrb[0].mxu0
  %v291 = vadd.f32 %v91, %v290
  %v292 = vpop.f32.mrb[0].mxu0
  %v293 = vadd.f32 %v91, %v292
  %v294 = vpop.f32.mrb[0].mxu0
  %v295 = vadd.f32 %v96, %v294
  %v296 = vpop.f32.mrb[0].mxu0
  %v297 = vadd.f32 %v96, %v296
  %298 = vmatprep.mubr.bf16.mxu0 0
  %299 = vmatmul.mubr.bf16.gmra.mrb[0].mxu0 %v209
  %v300 = vpop.f32.mrb[0].mxu0
  %v301 = vadd.f32 %v101, %v300
  %v302 = vpop.f32.mrb[0].mxu0
  %v303 = vadd.f32 %v101, %v302
  %v304 = vpop.f32.mrb[0].mxu0
  %v305 = vadd.f32 %v106, %v304
  %v306 = vpop.f32.mrb[0].mxu0
  %v307 = vadd.f32 %v106, %v306
  %308 = vmatprep.mubr.bf16.mxu0 0
  %309 = vmatmul.mubr.bf16.gmra.mrb[0].mxu0 %v212
  %v310 = vpop.f32.mrb[0].mxu0
  %v311 = vadd.f32 %v111, %v310
  %v312 = vpop.f32.mrb[0].mxu0
  %v313 = vadd.f32 %v111, %v312
  %v314 = vpop.f32.mrb[0].mxu0
  %v315 = vadd.f32 %v116, %v314
  %v316 = vpop.f32.mrb[0].mxu0
  %v317 = vadd.f32 %v116, %v316
  %318 = vmatprep.mubr.bf16.mxu0 0
  %319 = vmatmul.mubr.bf16.gmra.mrb[0].mxu0 %v215
  %v320 = vpop.f32.mrb[0].mxu0
  %v321 = vadd.f32 %v121, %v320
  %v322 = vpop.f32.mrb[0].mxu0
  %v323 = vadd.f32 %v121, %v322
  %v324 = vpop.f32.mrb[0].mxu0
  %v325 = vadd.f32 %v126, %v324
  %v326 = vpop.f32.mrb[0].mxu0
  %v327 = vadd.f32 %v126, %v326
  %328 = vmatprep.mubr.bf16.mxu0 0
  %329 = vmatmul.mubr.bf16.gmra.mrb[0].mxu0 %v218
  %v330 = vpop.f32.mrb[0].mxu0
  %v331 = vadd.f32 %v131, %v330
  %v332 = vpop.f32.mrb[0].mxu0
  %v333 = vadd.f32 %v131, %v332
  %v334 = vpop.f32.mrb[0].mxu0
  %v335 = vadd.f32 %v136, %v334
  %v336 = vpop.f32.mrb[0].mxu0
  %v337 = vadd.f32 %v136, %v336
  %338 = vmatprep.mubr.bf16.mxu0 0
  %339 = vmatmul.mubr.bf16.gmra.mrb[0].mxu0 %v221
  %v340 = vpop.f32.mrb[0].mxu0
  %v341 = vadd.f32 %v141, %v340
  %v342 = vpop.f32.mrb[0].mxu0
  %v343 = vadd.f32 %v141, %v342
  %v344 = vpop.f32.mrb[0].mxu0
  %v345 = vadd.f32 %v146, %v344
  %v346 = vpop.f32.mrb[0].mxu0
  %v347 = vadd.f32 %v146, %v346
  %348 = vdwg.mxu0
  %349 = vmatprep.subr.bf16.mxu0 %v234
  %350 = vmatpush1.bf16.msra.mxu0 %v231
  %351 = vmatprep.subr.bf16.mxu0 0
  %352 = vmatpush1.bf16.msra.mxu0 0
  %353 = vmatprep.subr.bf16.mxu0 0
  %354 = vmatpush1.bf16.msra.mxu0 0
  %355 = vmatprep.subr.bf16.mxu0 0
  %356 = vmatpush1.bf16.msra.mxu0 0
  %357 = vmatprep.subr.bf16.mxu0 0
  %358 = vmatpush1.bf16.msra.mxu0 0
  %359 = vmatprep.subr.bf16.mxu0 0
  %360 = vmatpush1.bf16.msra.mxu0 0
  %361 = vmatprep.subr.bf16.mxu0 0
  %362 = vmatpush1.bf16.msra.mxu0 0
  %363 = vmatprep.subr.bf16.mxu0 0
  %364 = vmatpush1.bf16.msra.mxu0 0
  %365 = vmatprep.subr.bf16.mxu0 0
  %366 = vmatpush1.bf16.msra.mxu0 0
  %367 = vmatprep.subr.bf16.mxu0 0
  %368 = vmatpush1.bf16.msra.mxu0 0
  %369 = vmatprep.subr.bf16.mxu0 0
  %370 = vmatpush1.bf16.msra.mxu0 0
  %371 = vmatprep.subr.bf16.mxu0 0
  %372 = vmatpush1.bf16.msra.mxu0 0
  %373 = vmatprep.subr.bf16.mxu0 0
  %374 = vmatpush1.bf16.msra.mxu0 0
  %375 = vmatprep.subr.bf16.mxu0 0
  %376 = vmatpush1.bf16.msra.mxu0 0
  %377 = vmatprep.subr.bf16.mxu0 0
  %378 = vmatpush1.bf16.msra.mxu0 0
  %379 = vmatprep.subr.bf16.mxu0 0
  %380 = vmatpush1.bf16.msra.mxu0 0
  %381 = vmatprep.mubr.bf16.mxu0 0
  %382 = vmatmul.mubr.bf16.gmra.mrb[0].mxu0 %v200
  %v383 = vpop.f32.mrb[0].mxu0
  %v384 = vadd.f32 %v71, %v383
  %v385 = vpop.f32.mrb[0].mxu0
  %v386 = vadd.f32 %v71, %v385
  %v387 = vpop.f32.mrb[0].mxu0
  %v388 = vadd.f32 %v76, %v387
  %v389 = vpop.f32.mrb[0].mxu0
  %v390 = vadd.f32 %v76, %v389
  %391 = vmatprep.mubr.bf16.mxu0 0
  %392 = vmatmul.mubr.bf16.gmra.mrb[0].mxu0 %v203
  %v393 = vpop.f32.mrb[0].mxu0
  %v394 = vadd.f32 %v81, %v393
  %v395 = vpop.f32.mrb[0].mxu0
  %v396 = vadd.f32 %v81, %v395
  %v397 = vpop.f32.mrb[0].mxu0
  %v398 = vadd.f32 %v86, %v397
  %v399 = vpop.f32.mrb[0].mxu0
  %v400 = vadd.f32 %v86, %v399
  %401 = vmatprep.mubr.bf16.mxu0 0
  %402 = vmatmul.mubr.bf16.gmra.mrb[0].mxu0 %v206
  %v403 = vpop.f32.mrb[0].mxu0
  %v404 = vadd.f32 %v91, %v403
  %v405 = vpop.f32.mrb[0].mxu0
  %v406 = vadd.f32 %v91, %v405
  %v407 = vpop.f32.mrb[0].mxu0
  %v408 = vadd.f32 %v96, %v407
  %v409 = vpop.f32.mrb[0].mxu0
  %v410 = vadd.f32 %v96, %v409
  %411 = vmatprep.mubr.bf16.mxu0 0
  %412 = vmatmul.mubr.bf16.gmra.mrb[0].mxu0 %v209
  %v413 = vpop.f32.mrb[0].mxu0
  %v414 = vadd.f32 %v101, %v413
  %v415 = vpop.f32.mrb[0].mxu0
  %v416 = vadd.f32 %v101, %v415
  %v417 = vpop.f32.mrb[0].mxu0
  %v418 = vadd.f32 %v106, %v417
  %v419 = vpop.f32.mrb[0].mxu0
  %v420 = vadd.f32 %v106, %v419
  %421 = vmatprep.mubr.bf16.mxu0 0
  %422 = vmatmul.mubr.bf16.gmra.mrb[0].mxu0 %v212
  %v423 = vpop.f32.mrb[0].mxu0
  %v424 = vadd.f32 %v111, %v423
  %v425 = vpop.f32.mrb[0].mxu0
  %v426 = vadd.f32 %v111, %v425
  %v427 = vpop.f32.mrb[0].mxu0
  %v428 = vadd.f32 %v116, %v427
  %v429 = vpop.f32.mrb[0].mxu0
  %v430 = vadd.f32 %v116, %v429
  %431 = vmatprep.mubr.bf16.mxu0 0
  %432 = vmatmul.mubr.bf16.gmra.mrb[0].mxu0 %v215
  %v433 = vpop.f32.mrb[0].mxu0
  %v434 = vadd.f32 %v121, %v433
  %v435 = vpop.f32.mrb[0].mxu0
  %v436 = vadd.f32 %v121, %v435
  %v437 = vpop.f32.mrb[0].mxu0
  %v438 = vadd.f32 %v126, %v437
  %v439 = vpop.f32.mrb[0].mxu0
  %v440 = vadd.f32 %v126, %v439
  %441 = vmatprep.mubr.bf16.mxu0 0
  %442 = vmatmul.mubr.bf16.gmra.mrb[0].mxu0 %v218
  %v443 = vpop.f32.mrb[0].mxu0
  %v444 = vadd.f32 %v131, %v443
  %v445 = vpop.f32.mrb[0].mxu0
  %v446 = vadd.f32 %v131, %v445
  %v447 = vpop.f32.mrb[0].mxu0
  %v448 = vadd.f32 %v136, %v447
  %v449 = vpop.f32.mrb[0].mxu0
  %v450 = vadd.f32 %v136, %v449
  %451 = vmatprep.mubr.bf16.mxu0 0
  %452 = vmatmul.mubr.bf16.gmra.mrb[0].mxu0 %v221
  %v453 = vpop.f32.mrb[0].mxu0
  %v454 = vadd.f32 %v141, %v453
  %v455 = vpop.f32.mrb[0].mxu0
  %v456 = vadd.f32 %v141, %v455
  %v457 = vpop.f32.mrb[0].mxu0
  %v458 = vadd.f32 %v146, %v457
  %v459 = vpop.f32.mrb[0].mxu0
  %v460 = vadd.f32 %v146, %v459
  %461 = vdwg.mxu0
  %v462 = vmax.f32 %v271, 0.0
  %v463 = vmax.f32 %v273, 0.0
  %v464 = vmax.f32 %v384, 0.0
  %v465 = vmax.f32 %v386, 0.0
  %v466 = vmax.f32 %v275, 0.0
  %v467 = vmax.f32 %v277, 0.0
  %v468 = vmax.f32 %v388, 0.0
  %v469 = vmax.f32 %v390, 0.0
  %v470 = vmax.f32 %v281, 0.0
  %v471 = vmax.f32 %v283, 0.0
  %v472 = vmax.f32 %v394, 0.0
  %v473 = vmax.f32 %v396, 0.0
  %v474 = vmax.f32 %v285, 0.0
  %v475 = vmax.f32 %v287, 0.0
  %v476 = vmax.f32 %v398, 0.0
  %v477 = vmax.f32 %v400, 0.0
  %v478 = vmax.f32 %v291, 0.0
  %v479 = vmax.f32 %v293, 0.0
  %v480 = vmax.f32 %v404, 0.0
  %v481 = vmax.f32 %v406, 0.0
  %v482 = vmax.f32 %v295, 0.0
  %v483 = vmax.f32 %v297, 0.0
  %v484 = vmax.f32 %v408, 0.0
  %v485 = vmax.f32 %v410, 0.0
  %v486 = vmax.f32 %v301, 0.0
  %v487 = vmax.f32 %v303, 0.0
  %v488 = vmax.f32 %v414, 0.0
  %v489 = vmax.f32 %v416, 0.0
  %v490 = vmax.f32 %v305, 0.0
  %v491 = vmax.f32 %v307, 0.0
  %v492 = vmax.f32 %v418, 0.0
  %v493 = vmax.f32 %v420, 0.0
  %v494 = vmax.f32 %v311, 0.0
  %v495 = vmax.f32 %v313, 0.0
  %v496 = vmax.f32 %v424, 0.0
  %v497 = vmax.f32 %v426, 0.0
  %v498 = vmax.f32 %v315, 0.0
  %v499 = vmax.f32 %v317, 0.0
  %v500 = vmax.f32 %v428, 0.0
  %v501 = vmax.f32 %v430, 0.0
  %v502 = vmax.f32 %v321, 0.0
  %v503 = vmax.f32 %v323, 0.0
  %v504 = vmax.f32 %v434, 0.0
  %v505 = vmax.f32 %v436, 0.0
  %v506 = vmax.f32 %v325, 0.0
  %v507 = vmax.f32 %v327, 0.0
  %v508 = vmax.f32 %v438, 0.0
  %v509 = vmax.f32 %v440, 0.0
  %v510 = vmax.f32 %v331, 0.0
  %v511 = vmax.f32 %v333, 0.0
  %v512 = vmax.f32 %v444, 0.0
  %v513 = vmax.f32 %v446, 0.0
  %v514 = vmax.f32 %v335, 0.0
  %v515 = vmax.f32 %v337, 0.0
  %v516 = vmax.f32 %v448, 0.0
  %v517 = vmax.f32 %v450, 0.0
  %v518 = vmax.f32 %v341, 0.0
  %v519 = vmax.f32 %v343, 0.0
  %v520 = vmax.f32 %v454, 0.0
  %v521 = vmax.f32 %v456, 0.0
  %v522 = vmax.f32 %v345, 0.0
  %v523 = vmax.f32 %v347, 0.0
  %v524 = vmax.f32 %v458, 0.0
  %v525 = vmax.f32 %v460, 0.0
  %v526 = vld [vmem:[%s3] sm:$0xf]
  %v527 = vld [vmem:[%s3 + $0x4] sm:$0xf]
  %v528 = vld [vmem:[%s3 + $0x8] sm:$0xf]
  %v529 = vld [vmem:[%s3 + $0xc] sm:$0xf]
  %v530 = vld [vmem:[%s3 + $0x10] sm:$0xf]
  %v531 = vld [vmem:[%s3 + $0x14] sm:$0xf]
  %v532 = vld [vmem:[%s3 + $0x18] sm:$0xf]
  %v533 = vld [vmem:[%s3 + $0x1c] sm:$0xf]
  %v534 = vpack.c.bf16 %v466, %v462
  %v535 = vpack.c.bf16 %v467, %v463
  %v536 = vpack.c.bf16 %v468, %v464
  %v537 = vpack.c.bf16 %v469, %v465
  %v538 = vpack.c.bf16 %v474, %v470
  %v539 = vpack.c.bf16 %v475, %v471
  %v540 = vpack.c.bf16 %v476, %v472
  %v541 = vpack.c.bf16 %v477, %v473
  %v542 = vpack.c.bf16 %v482, %v478
  %v543 = vpack.c.bf16 %v483, %v479
  %v544 = vpack.c.bf16 %v484, %v480
  %v545 = vpack.c.bf16 %v485, %v481
  %v546 = vpack.c.bf16 %v490, %v486
  %v547 = vpack.c.bf16 %v491, %v487
  %v548 = vpack.c.bf16 %v492, %v488
  %v549 = vpack.c.bf16 %v493, %v489
  %v550 = vpack.c.bf16 %v498, %v494
  %v551 = vpack.c.bf16 %v499, %v495
  %v552 = vpack.c.bf16 %v500, %v496
  %v553 = vpack.c.bf16 %v501, %v497
  %v554 = vpack.c.bf16 %v506, %v502
  %v555 = vpack.c.bf16 %v507, %v503
  %v556 = vpack.c.bf16 %v508, %v504
  %v557 = vpack.c.bf16 %v509, %v505
  %v558 = vpack.c.bf16 %v514, %v510
  %v559 = vpack.c.bf16 %v515, %v511
  %v560 = vpack.c.bf16 %v516, %v512
  %v561 = vpack.c.bf16 %v517, %v513
  %v562 = vpack.c.bf16 %v522, %v518
  %v563 = vpack.c.bf16 %v523, %v519
  %v564 = vpack.c.bf16 %v524, %v520
  %v565 = vpack.c.bf16 %v525, %v521
  %v566 = vld [vmem:[%s4] sm:$0xff]
  %v567 = vld [vmem:[%s4 + $0x8] sm:$0xff]
  %v568 = vld [vmem:[%s4 + $0x10] sm:$0xff]
  %v569 = vld [vmem:[%s4 + $0x18] sm:$0xff]
  %v570 = vld [vmem:[%s4 + $0x20] sm:$0xff]
  %v571 = vld [vmem:[%s4 + $0x28] sm:$0xff]
  %v572 = vld [vmem:[%s4 + $0x30] sm:$0xff]
  %v573 = vld [vmem:[%s4 + $0x38] sm:$0xff]
  %575 = vset.pattern.permute.xlu0 0
  %576 = vperm.xlu0 %575, %v566
  %v577 = vpop.permute.xlu0 %576
  %580 = vset.pattern.permute.xlu0 0
  %581 = vperm.xlu0 %580, %v567
  %v582 = vpop.permute.xlu0 %581
  %585 = vset.pattern.permute.xlu0 0
  %586 = vperm.xlu0 %585, %v568
  %v587 = vpop.permute.xlu0 %586
  %590 = vset.pattern.permute.xlu0 0
  %591 = vperm.xlu0 %590, %v569
  %v592 = vpop.permute.xlu0 %591
  %595 = vset.pattern.permute.xlu0 0
  %596 = vperm.xlu0 %595, %v570
  %v597 = vpop.permute.xlu0 %596
  %600 = vset.pattern.permute.xlu0 0
  %601 = vperm.xlu0 %600, %v571
  %v602 = vpop.permute.xlu0 %601
  %605 = vset.pattern.permute.xlu0 0
  %606 = vperm.xlu0 %605, %v572
  %v607 = vpop.permute.xlu0 %606
  %610 = vset.pattern.permute.xlu0 0
  %611 = vperm.xlu0 %610, %v573
  %v612 = vpop.permute.xlu0 %611
  %v622 = vunpack.c.l.b16 %v526
  %v623 = vunpack.c.l.b16 %v527
  %v624 = vunpack.c.l.b16 %v528
  %v625 = vunpack.c.l.b16 %v529
  %v626 = vunpack.c.l.b16 %v530
  %v627 = vunpack.c.l.b16 %v531
  %v628 = vunpack.c.l.b16 %v532
  %v629 = vunpack.c.l.b16 %v533
  %v630 = vpack.c.b16 %v623, %v622
  %v631 = vpack.c.b16 %v625, %v624
  %v632 = vpack.c.b16 %v627, %v626
  %v633 = vpack.c.b16 %v629, %v628
  %638 = vmatprep.subr.bf16.mxu0 %v535
  %639 = vmatpush1.bf16.msra.mxu0 %v534
  %640 = vmatprep.subr.bf16.mxu0 %v539
  %641 = vmatpush1.bf16.msra.mxu0 %v538
  %642 = vmatprep.subr.bf16.mxu0 %v543
  %643 = vmatpush1.bf16.msra.mxu0 %v542
  %644 = vmatprep.subr.bf16.mxu0 %v547
  %645 = vmatpush1.bf16.msra.mxu0 %v546
  %646 = vmatprep.subr.bf16.mxu0 %v551
  %647 = vmatpush1.bf16.msra.mxu0 %v550
  %648 = vmatprep.subr.bf16.mxu0 %v555
  %649 = vmatpush1.bf16.msra.mxu0 %v554
  %650 = vmatprep.subr.bf16.mxu0 %v559
  %651 = vmatpush1.bf16.msra.mxu0 %v558
  %652 = vmatprep.subr.bf16.mxu0 %v563
  %653 = vmatpush1.bf16.msra.mxu0 %v562
  %654 = vmatprep.subr.bf16.mxu0 0
  %655 = vmatpush1.bf16.msra.mxu0 0
  %656 = vmatprep.subr.bf16.mxu0 0
  %657 = vmatpush1.bf16.msra.mxu0 0
  %658 = vmatprep.subr.bf16.mxu0 0
  %659 = vmatpush1.bf16.msra.mxu0 0
  %660 = vmatprep.subr.bf16.mxu0 0
  %661 = vmatpush1.bf16.msra.mxu0 0
  %662 = vmatprep.subr.bf16.mxu0 0
  %663 = vmatpush1.bf16.msra.mxu0 0
  %664 = vmatprep.subr.bf16.mxu0 0
  %665 = vmatpush1.bf16.msra.mxu0 0
  %666 = vmatprep.subr.bf16.mxu0 0
  %667 = vmatpush1.bf16.msra.mxu0 0
  %668 = vmatprep.subr.bf16.mxu0 0
  %669 = vmatpush1.bf16.msra.mxu0 0
  %670 = vmatprep.mubr.bf16.mxu0 0
  %671 = vmatmul.mubr.bf16.gmra.mrb[0].mxu0 %v630
  %v672 = vpop.f32.mrb[0].mxu0
  %v673 = vadd.f32 %v577, %v672
  %v674 = vpop.f32.mrb[0].mxu0
  %v675 = vadd.f32 %v577, %v674
  %v676 = vpop.f32.mrb[0].mxu0
  %v677 = vadd.f32 %v582, %v676
  %v678 = vpop.f32.mrb[0].mxu0
  %v679 = vadd.f32 %v582, %v678
  %680 = vmatprep.mubr.bf16.mxu0 0
  %681 = vmatmul.mubr.bf16.gmra.mrb[0].mxu0 %v631
  %v682 = vpop.f32.mrb[0].mxu0
  %v683 = vadd.f32 %v587, %v682
  %v684 = vpop.f32.mrb[0].mxu0
  %v685 = vadd.f32 %v587, %v684
  %v686 = vpop.f32.mrb[0].mxu0
  %v687 = vadd.f32 %v592, %v686
  %v688 = vpop.f32.mrb[0].mxu0
  %v689 = vadd.f32 %v592, %v688
  %690 = vmatprep.mubr.bf16.mxu0 0
  %691 = vmatmul.mubr.bf16.gmra.mrb[0].mxu0 %v632
  %v692 = vpop.f32.mrb[0].mxu0
  %v693 = vadd.f32 %v597, %v692
  %v694 = vpop.f32.mrb[0].mxu0
  %v695 = vadd.f32 %v597, %v694
  %v696 = vpop.f32.mrb[0].mxu0
  %v697 = vadd.f32 %v602, %v696
  %v698 = vpop.f32.mrb[0].mxu0
  %v699 = vadd.f32 %v602, %v698
  %700 = vmatprep.mubr.bf16.mxu0 0
  %701 = vmatmul.mubr.bf16.gmra.mrb[0].mxu0 %v633
  %v702 = vpop.f32.mrb[0].mxu0
  %v703 = vadd.f32 %v607, %v702
  %v704 = vpop.f32.mrb[0].mxu0
  %v705 = vadd.f32 %v607, %v704
  %v706 = vpop.f32.mrb[0].mxu0
  %v707 = vadd.f32 %v612, %v706
  %v708 = vpop.f32.mrb[0].mxu0
  %v709 = vadd.f32 %v612, %v708
  %710 = vdwg.mxu0
  %711 = vmatprep.subr.bf16.mxu0 %v537
  %712 = vmatpush1.bf16.msra.mxu0 %v536
  %713 = vmatprep.subr.bf16.mxu0 %v541
  %714 = vmatpush1.bf16.msra.mxu0 %v540
  %715 = vmatprep.subr.bf16.mxu0 %v545
  %716 = vmatpush1.bf16.msra.mxu0 %v544
  %717 = vmatprep.subr.bf16.mxu0 %v549
  %718 = vmatpush1.bf16.msra.mxu0 %v548
  %719 = vmatprep.subr.bf16.mxu0 %v553
  %720 = vmatpush1.bf16.msra.mxu0 %v552
  %721 = vmatprep.subr.bf16.mxu0 %v557
  %722 = vmatpush1.bf16.msra.mxu0 %v556
  %723 = vmatprep.subr.bf16.mxu0 %v561
  %724 = vmatpush1.bf16.msra.mxu0 %v560
  %725 = vmatprep.subr.bf16.mxu0 %v565
  %726 = vmatpush1.bf16.msra.mxu0 %v564
  %727 = vmatprep.subr.bf16.mxu0 0
  %728 = vmatpush1.bf16.msra.mxu0 0
  %729 = vmatprep.subr.bf16.mxu0 0
  %730 = vmatpush1.bf16.msra.mxu0 0
  %731 = vmatprep.subr.bf16.mxu0 0
  %732 = vmatpush1.bf16.msra.mxu0 0
  %733 = vmatprep.subr.bf16.mxu0 0
  %734 = vmatpush1.bf16.msra.mxu0 0
  %735 = vmatprep.subr.bf16.mxu0 0
  %736 = vmatpush1.bf16.msra.mxu0 0
  %737 = vmatprep.subr.bf16.mxu0 0
  %738 = vmatpush1.bf16.msra.mxu0 0
  %739 = vmatprep.subr.bf16.mxu0 0
  %740 = vmatpush1.bf16.msra.mxu0 0
  %741 = vmatprep.subr.bf16.mxu0 0
  %742 = vmatpush1.bf16.msra.mxu0 0
  %743 = vmatprep.mubr.bf16.mxu0 0
  %744 = vmatmul.mubr.bf16.gmra.mrb[0].mxu0 %v630
  %v745 = vpop.f32.mrb[0].mxu0
  %v746 = vadd.f32 %v577, %v745
  %v747 = vpop.f32.mrb[0].mxu0
  %v748 = vadd.f32 %v577, %v747
  %v749 = vpop.f32.mrb[0].mxu0
  %v750 = vadd.f32 %v582, %v749
  %v751 = vpop.f32.mrb[0].mxu0
  %v752 = vadd.f32 %v582, %v751
  %753 = vmatprep.mubr.bf16.mxu0 0
  %754 = vmatmul.mubr.bf16.gmra.mrb[0].mxu0 %v631
  %v755 = vpop.f32.mrb[0].mxu0
  %v756 = vadd.f32 %v587, %v755
  %v757 = vpop.f32.mrb[0].mxu0
  %v758 = vadd.f32 %v587, %v757
  %v759 = vpop.f32.mrb[0].mxu0
  %v760 = vadd.f32 %v592, %v759
  %v761 = vpop.f32.mrb[0].mxu0
  %v762 = vadd.f32 %v592, %v761
  %763 = vmatprep.mubr.bf16.mxu0 0
  %764 = vmatmul.mubr.bf16.gmra.mrb[0].mxu0 %v632
  %v765 = vpop.f32.mrb[0].mxu0
  %v766 = vadd.f32 %v597, %v765
  %v767 = vpop.f32.mrb[0].mxu0
  %v768 = vadd.f32 %v597, %v767
  %v769 = vpop.f32.mrb[0].mxu0
  %v770 = vadd.f32 %v602, %v769
  %v771 = vpop.f32.mrb[0].mxu0
  %v772 = vadd.f32 %v602, %v771
  %773 = vmatprep.mubr.bf16.mxu0 0
  %774 = vmatmul.mubr.bf16.gmra.mrb[0].mxu0 %v633
  %v775 = vpop.f32.mrb[0].mxu0
  %v776 = vadd.f32 %v607, %v775
  %v777 = vpop.f32.mrb[0].mxu0
  %v778 = vadd.f32 %v607, %v777
  %v779 = vpop.f32.mrb[0].mxu0
  %v780 = vadd.f32 %v612, %v779
  %v781 = vpop.f32.mrb[0].mxu0
  %v782 = vadd.f32 %v612, %v781
  %783 = vdwg.mxu0
  %v784 = vmax.f32 %v673, 0.0
  %v785 = vmax.f32 %v675, 0.0
  %v786 = vmax.f32 %v746, 0.0
  %v787 = vmax.f32 %v748, 0.0
  %v788 = vmax.f32 %v677, 0.0
  %v789 = vmax.f32 %v679, 0.0
  %v790 = vmax.f32 %v750, 0.0
  %v791 = vmax.f32 %v752, 0.0
  %v792 = vmax.f32 %v683, 0.0
  %v793 = vmax.f32 %v685, 0.0
  %v794 = vmax.f32 %v756, 0.0
  %v795 = vmax.f32 %v758, 0.0
  %v796 = vmax.f32 %v687, 0.0
  %v797 = vmax.f32 %v689, 0.0
  %v798 = vmax.f32 %v760, 0.0
  %v799 = vmax.f32 %v762, 0.0
  %v800 = vmax.f32 %v693, 0.0
  %v801 = vmax.f32 %v695, 0.0
  %v802 = vmax.f32 %v766, 0.0
  %v803 = vmax.f32 %v768, 0.0
  %v804 = vmax.f32 %v697, 0.0
  %v805 = vmax.f32 %v699, 0.0
  %v806 = vmax.f32 %v770, 0.0
  %v807 = vmax.f32 %v772, 0.0
  %v808 = vmax.f32 %v703, 0.0
  %v809 = vmax.f32 %v705, 0.0
  %v810 = vmax.f32 %v776, 0.0
  %v811 = vmax.f32 %v778, 0.0
  %v812 = vmax.f32 %v707, 0.0
  %v813 = vmax.f32 %v709, 0.0
  %v814 = vmax.f32 %v780, 0.0
  %v815 = vmax.f32 %v782, 0.0
  %v816 = vld [vmem:[%s5] sm:$0xf]
  %v817 = vld [vmem:[%s5 + $0x4] sm:$0xf]
  %v818 = vld [vmem:[%s5 + $0x8] sm:$0xf]
  %v819 = vld [vmem:[%s5 + $0xc] sm:$0xf]
  %v820 = vpack.c.bf16 %v788, %v784
  %v821 = vpack.c.bf16 %v789, %v785
  %v822 = vpack.c.bf16 %v790, %v786
  %v823 = vpack.c.bf16 %v791, %v787
  %v824 = vpack.c.bf16 %v796, %v792
  %v825 = vpack.c.bf16 %v797, %v793
  %v826 = vpack.c.bf16 %v798, %v794
  %v827 = vpack.c.bf16 %v799, %v795
  %v828 = vpack.c.bf16 %v804, %v800
  %v829 = vpack.c.bf16 %v805, %v801
  %v830 = vpack.c.bf16 %v806, %v802
  %v831 = vpack.c.bf16 %v807, %v803
  %v832 = vpack.c.bf16 %v812, %v808
  %v833 = vpack.c.bf16 %v813, %v809
  %v834 = vpack.c.bf16 %v814, %v810
  %v835 = vpack.c.bf16 %v815, %v811
  %v836 = vld [vmem:[%s6] sm:$0xff]
  %v837 = vld [vmem:[%s6 + $0x8] sm:$0xff]
  %v838 = vld [vmem:[%s6 + $0x10] sm:$0xff]
  %v839 = vld [vmem:[%s6 + $0x18] sm:$0xff]
  %841 = vset.pattern.permute.xlu0 0
  %842 = vperm.xlu0 %841, %v836
  %v843 = vpop.permute.xlu0 %842
  %846 = vset.pattern.permute.xlu0 0
  %847 = vperm.xlu0 %846, %v837
  %v848 = vpop.permute.xlu0 %847
  %851 = vset.pattern.permute.xlu0 0
  %852 = vperm.xlu0 %851, %v838
  %v853 = vpop.permute.xlu0 %852
  %856 = vset.pattern.permute.xlu0 0
  %857 = vperm.xlu0 %856, %v839
  %v858 = vpop.permute.xlu0 %857
  %v864 = vunpack.c.l.b16 %v816
  %v865 = vunpack.c.l.b16 %v817
  %v866 = vunpack.c.l.b16 %v818
  %v867 = vunpack.c.l.b16 %v819
  %v868 = vpack.c.b16 %v865, %v864
  %v869 = vpack.c.b16 %v867, %v866
  %vm870 = vcmask 523264
  %v872 = vsel %vm870, %v868, 0
  %v875 = vsel %vm870, %v869, 0
  %877 = vmatprep.subr.bf16.mxu0 %v821
  %878 = vmatpush1.bf16.msra.mxu0 %v820
  %879 = vmatprep.subr.bf16.mxu0 %v825
  %880 = vmatpush1.bf16.msra.mxu0 %v824
  %881 = vmatprep.subr.bf16.mxu0 %v829
  %882 = vmatpush1.bf16.msra.mxu0 %v828
  %883 = vmatprep.subr.bf16.mxu0 %v833
  %884 = vmatpush1.bf16.msra.mxu0 %v832
  %885 = vmatprep.subr.bf16.mxu0 0
  %886 = vmatpush1.bf16.msra.mxu0 0
  %887 = vmatprep.subr.bf16.mxu0 0
  %888 = vmatpush1.bf16.msra.mxu0 0
  %889 = vmatprep.subr.bf16.mxu0 0
  %890 = vmatpush1.bf16.msra.mxu0 0
  %891 = vmatprep.subr.bf16.mxu0 0
  %892 = vmatpush1.bf16.msra.mxu0 0
  %893 = vmatprep.subr.bf16.mxu0 0
  %894 = vmatpush1.bf16.msra.mxu0 0
  %895 = vmatprep.subr.bf16.mxu0 0
  %896 = vmatpush1.bf16.msra.mxu0 0
  %897 = vmatprep.subr.bf16.mxu0 0
  %898 = vmatpush1.bf16.msra.mxu0 0
  %899 = vmatprep.subr.bf16.mxu0 0
  %900 = vmatpush1.bf16.msra.mxu0 0
  %901 = vmatprep.subr.bf16.mxu0 0
  %902 = vmatpush1.bf16.msra.mxu0 0
  %903 = vmatprep.subr.bf16.mxu0 0
  %904 = vmatpush1.bf16.msra.mxu0 0
  %905 = vmatprep.subr.bf16.mxu0 0
  %906 = vmatpush1.bf16.msra.mxu0 0
  %907 = vmatprep.subr.bf16.mxu0 0
  %908 = vmatpush1.bf16.msra.mxu0 0
  %909 = vmatprep.mubr.bf16.mxu0 0
  %910 = vmatmul.mubr.bf16.gmra.mrb[0].mxu0 %v872
  %v911 = vpop.f32.mrb[0].mxu0
  %v912 = vadd.f32 %v843, %v911
  %v913 = vpop.f32.mrb[0].mxu0
  %v914 = vadd.f32 %v843, %v913
  %v915 = vpop.f32.mrb[0].mxu0
  %v916 = vadd.f32 %v848, %v915
  %v917 = vpop.f32.mrb[0].mxu0
  %v918 = vadd.f32 %v848, %v917
  %919 = vmatprep.mubr.bf16.mxu0 0
  %920 = vmatmul.mubr.bf16.gmra.mrb[0].mxu0 %v875
  %v921 = vpop.f32.mrb[0].mxu0
  %v922 = vadd.f32 %v853, %v921
  %v923 = vpop.f32.mrb[0].mxu0
  %v924 = vadd.f32 %v853, %v923
  %v925 = vpop.f32.mrb[0].mxu0
  %v926 = vadd.f32 %v858, %v925
  %v927 = vpop.f32.mrb[0].mxu0
  %v928 = vadd.f32 %v858, %v927
  %929 = vdwg.mxu0
  %930 = vmatprep.subr.bf16.mxu0 %v823
  %931 = vmatpush1.bf16.msra.mxu0 %v822
  %932 = vmatprep.subr.bf16.mxu0 %v827
  %933 = vmatpush1.bf16.msra.mxu0 %v826
  %934 = vmatprep.subr.bf16.mxu0 %v831
  %935 = vmatpush1.bf16.msra.mxu0 %v830
  %936 = vmatprep.subr.bf16.mxu0 %v835
  %937 = vmatpush1.bf16.msra.mxu0 %v834
  %938 = vmatprep.subr.bf16.mxu0 0
  %939 = vmatpush1.bf16.msra.mxu0 0
  %940 = vmatprep.subr.bf16.mxu0 0
  %941 = vmatpush1.bf16.msra.mxu0 0
  %942 = vmatprep.subr.bf16.mxu0 0
  %943 = vmatpush1.bf16.msra.mxu0 0
  %944 = vmatprep.subr.bf16.mxu0 0
  %945 = vmatpush1.bf16.msra.mxu0 0
  %946 = vmatprep.subr.bf16.mxu0 0
  %947 = vmatpush1.bf16.msra.mxu0 0
  %948 = vmatprep.subr.bf16.mxu0 0
  %949 = vmatpush1.bf16.msra.mxu0 0
  %950 = vmatprep.subr.bf16.mxu0 0
  %951 = vmatpush1.bf16.msra.mxu0 0
  %952 = vmatprep.subr.bf16.mxu0 0
  %953 = vmatpush1.bf16.msra.mxu0 0
  %954 = vmatprep.subr.bf16.mxu0 0
  %955 = vmatpush1.bf16.msra.mxu0 0
  %956 = vmatprep.subr.bf16.mxu0 0
  %957 = vmatpush1.bf16.msra.mxu0 0
  %958 = vmatprep.subr.bf16.mxu0 0
  %959 = vmatpush1.bf16.msra.mxu0 0
  %960 = vmatprep.subr.bf16.mxu0 0
  %961 = vmatpush1.bf16.msra.mxu0 0
  %962 = vmatprep.mubr.bf16.mxu0 0
  %963 = vmatmul.mubr.bf16.gmra.mrb[0].mxu0 %v872
  %v964 = vpop.f32.mrb[0].mxu0
  %v965 = vadd.f32 %v843, %v964
  %v966 = vpop.f32.mrb[0].mxu0
  %v967 = vadd.f32 %v843, %v966
  %v968 = vpop.f32.mrb[0].mxu0
  %v969 = vadd.f32 %v848, %v968
  %v970 = vpop.f32.mrb[0].mxu0
  %v971 = vadd.f32 %v848, %v970
  %972 = vmatprep.mubr.bf16.mxu0 0
  %973 = vmatmul.mubr.bf16.gmra.mrb[0].mxu0 %v875
  %v974 = vpop.f32.mrb[0].mxu0
  %v975 = vadd.f32 %v853, %v974
  %v976 = vpop.f32.mrb[0].mxu0
  %v977 = vadd.f32 %v853, %v976
  %v978 = vpop.f32.mrb[0].mxu0
  %v979 = vadd.f32 %v858, %v978
  %v980 = vpop.f32.mrb[0].mxu0
  %v981 = vadd.f32 %v858, %v980
  %982 = vdwg.mxu0
  %v983 = vmax.f32 %v912, 0.0
  %v984 = vmax.f32 %v914, 0.0
  %v985 = vmax.f32 %v965, 0.0
  %v986 = vmax.f32 %v967, 0.0
  %v987 = vmax.f32 %v916, 0.0
  %v988 = vmax.f32 %v918, 0.0
  %v989 = vmax.f32 %v969, 0.0
  %v990 = vmax.f32 %v971, 0.0
  %v991 = vmax.f32 %v922, 0.0
  %v992 = vmax.f32 %v924, 0.0
  %v993 = vmax.f32 %v975, 0.0
  %v994 = vmax.f32 %v977, 0.0
  %v995 = vmax.f32 %v926, 0.0
  %v996 = vmax.f32 %v928, 0.0
  %v997 = vmax.f32 %v979, 0.0
  %v998 = vmax.f32 %v981, 0.0
  %v999 = vld [vmem:[%s7] sm:$0xff]
  %v1000 = vld [vmem:[%s7 + $0x8] sm:$0xff]
  %v1001 = vld [vmem:[%s7 + $0x10] sm:$0xff]
  %v1002 = vld [vmem:[%s7 + $0x18] sm:$0xff]
  %1004 = vset.pattern.permute.xlu0 0
  %1005 = vperm.xlu0 %1004, %v999
  %v1006 = vpop.permute.xlu0 %1005
  %1009 = vset.pattern.permute.xlu0 0
  %1010 = vperm.xlu0 %1009, %v1000
  %v1011 = vpop.permute.xlu0 %1010
  %1014 = vset.pattern.permute.xlu0 0
  %1015 = vperm.xlu0 %1014, %v1001
  %v1016 = vpop.permute.xlu0 %1015
  %1019 = vset.pattern.permute.xlu0 0
  %1020 = vperm.xlu0 %1019, %v1002
  %v1021 = vpop.permute.xlu0 %1020
  %v1023 = vmul.f32 %v983, %v1006
  %v1024 = vmul.f32 %v984, %v1006
  %v1025 = vmul.f32 %v985, %v1006
  %v1026 = vmul.f32 %v986, %v1006
  %v1027 = vmul.f32 %v987, %v1011
  %v1028 = vmul.f32 %v988, %v1011
  %v1029 = vmul.f32 %v989, %v1011
  %v1030 = vmul.f32 %v990, %v1011
  %v1031 = vmul.f32 %v991, %v1016
  %v1032 = vmul.f32 %v992, %v1016
  %v1033 = vmul.f32 %v993, %v1016
  %v1034 = vmul.f32 %v994, %v1016
  %v1035 = vmul.f32 %v995, %v1021
  %v1036 = vmul.f32 %v996, %v1021
  %v1037 = vmul.f32 %v997, %v1021
  %v1038 = vmul.f32 %v998, %v1021
  %v1039 = vadd.f32 %v1023, %v1027
  %v1040 = vadd.f32 %v1039, %v1031
  %v1041 = vadd.f32 %v1040, %v1035
  %v1042 = vrot.slane %v1041, 4
  %v1043 = vadd.f32 %v1041, %v1042
  %v1044 = vrot.slane %v1043, 2
  %v1045 = vadd.f32 %v1043, %v1044
  %v1046 = vrot.slane %v1045, 1
  %v1047 = vadd.f32 %v1045, %v1046
  %v1048 = vadd.f32 %v1024, %v1028
  %v1049 = vadd.f32 %v1048, %v1032
  %v1050 = vadd.f32 %v1049, %v1036
  %v1051 = vrot.slane %v1050, 4
  %v1052 = vadd.f32 %v1050, %v1051
  %v1053 = vrot.slane %v1052, 2
  %v1054 = vadd.f32 %v1052, %v1053
  %v1055 = vrot.slane %v1054, 1
  %v1056 = vadd.f32 %v1054, %v1055
  %v1057 = vadd.f32 %v1025, %v1029
  %v1058 = vadd.f32 %v1057, %v1033
  %v1059 = vadd.f32 %v1058, %v1037
  %v1060 = vrot.slane %v1059, 4
  %v1061 = vadd.f32 %v1059, %v1060
  %v1062 = vrot.slane %v1061, 2
  %v1063 = vadd.f32 %v1061, %v1062
  %v1064 = vrot.slane %v1063, 1
  %v1065 = vadd.f32 %v1063, %v1064
  %v1066 = vadd.f32 %v1026, %v1030
  %v1067 = vadd.f32 %v1066, %v1034
  %v1068 = vadd.f32 %v1067, %v1038
  %v1069 = vrot.slane %v1068, 4
  %v1070 = vadd.f32 %v1068, %v1069
  %v1071 = vrot.slane %v1070, 2
  %v1072 = vadd.f32 %v1070, %v1071
  %v1073 = vrot.slane %v1072, 1
  %v1074 = vadd.f32 %v1072, %v1073
  %s1075 = sld [smem:[#allocation2]]
  %v1076 = vstv %s1075
  %v1077 = vadd.f32 %v1047, %v1076
  %v1078 = vadd.f32 %v1056, %v1076
  %v1079 = vadd.f32 %v1065, %v1076
  %v1080 = vadd.f32 %v1074, %v1076
  %v1081 = vsub.f32 0.0, %v1077
  %v1082 = vsub.f32 0.0, %v1078
  %v1083 = vsub.f32 0.0, %v1079
  %v1084 = vsub.f32 0.0, %v1080
  %v1085 = vmul.f32 %v1081, 1.442695
  %v1086 = vpow.pop %v1085
  %v1087 = vmul.f32 %v1082, 1.442695
  %v1088 = vpow.pop %v1087
  %v1089 = vmul.f32 %v1083, 1.442695
  %v1090 = vpow.pop %v1089
  %v1091 = vmul.f32 %v1084, 1.442695
  %v1092 = vpow.pop %v1091
  %v1093 = vadd.f32 %v1086, 1.0
  %v1094 = vadd.f32 %v1088, 1.0
  %v1095 = vadd.f32 %v1090, 1.0
  %v1096 = vadd.f32 %v1092, 1.0
  %v1097 = vrcp.pop %v1093
  %v1098 = vmul.f32 1.0, %v1097
  %v1099 = vrcp.pop %v1094
  %v1100 = vmul.f32 1.0, %v1099
  %v1101 = vrcp.pop %v1095
  %v1102 = vmul.f32 1.0, %v1101
  %v1103 = vrcp.pop %v1096
  %v1104 = vmul.f32 1.0, %v1103
  %v1109 = vcombine.low %v1098, %v1100
  %v1110 = vcombine.low %v1102, %v1104
  %v1112 = vunpack.c.l.s4 1966171168
  %v1113 = vunpack.c.0.s8 %v1112
  %v1114 = vlaneseq
  %v1115 = vshrl.u32 %v1114, 7
  %v1116 = vsub.s32 %v1113, %v1115
  %v1117 = vrot.slane %v1109, %v1116
  %v1119 = vunpack.c.l.s4 1966171168
  %v1120 = vunpack.c.0.s8 %v1119
  %v1121 = vlaneseq
  %v1122 = vshrl.u32 %v1121, 7
  %v1123 = vsub.s32 %v1120, %v1122
  %v1124 = vrot.slane %v1110, %v1123
  %v1125 = vcombine.low %v1117, %v1124
  %v1127 = vunpack.c.l.s4 1966171168
  %v1128 = vunpack.c.0.s8 %v1127
  %v1129 = vlaneseq
  %v1130 = vshrl.u32 %v1129, 7
  %v1131 = vsub.s32 %v1128, %v1130
  %v1132 = vrot.slane %v1125, %v1131
  %v1134 = vlaneseq
  %vm1135 = vcmp.ge.s32.totalorder %v1134, 0
  %vm1136 = vcmp.lt.s32.totalorder %v1134, 512
  %vm1137 = vmand %vm1135, %vm1136
  %1138 = vst.msk [vmem:[%s9] sm:$0xf] %vm1137, %v1132
  // Predicated region
  $region38: #{titanic_forward.1} parent=0 // pred_check
    _
  $region39: #{titanic_forward.1} parent=0 // pred_check_branch
    %1140 = sbr.rel (0) target = $region41
  $region40: #{titanic_forward.1} parent=0 // pred_region
    _
  $region41: #{titanic_forward.1} parent=0 // pred_fallthru
    _
  // Predicated region
  $region42: #{titanic_forward.1} parent=0 // pred_check
    _
  $region43: #{titanic_forward.1} parent=0 // pred_check_branch
    %1142 = sbr.rel (0) target = $region45
  $region44: #{titanic_forward.1} parent=0 // pred_region
    _
  $region45: #{titanic_forward.1} parent=0 // pred_fallthru
    _

</llo_original>
